<compile_context>
chip_gen: v7x
topology: tpu7x:2x2x1
jax: 0.10.0
libtpu: 0.0.40
codegen_flags: <defaults>
</compile_context>

<pallas_src>
import functools
import math

import jax
import jax.numpy as jnp
from jax.experimental import pallas as pl
from jax.experimental.pallas import tpu as pltpu


def _round_up(n, m):
    return ((n + m - 1) // m) * m


# --------------------------------------------------------------------------
# Kernel
# --------------------------------------------------------------------------
def _disc_mlp_kernel(x_ref, e_ref, w1i_ref, w1e_ref, b1_ref,
                     w2_ref, b2_ref, w3_ref, b3_ref, o_ref):
    # x:   (TB, D_img)  bf16      e:   (TB, E)    bf16
    # w1i: (D_img, H4p) bf16      w1e: (E, H4p)   bf16     b1: (1, H4p) f32
    # w2:  (H4p, H2p)   bf16      b2:  (1, H2p)   f32
    # w3:  (1, H2p)     f32       b3:  (1, 1)     f32
    # o:   (1, 1, TB)   f32   (lane-dense packed logits for this batch tile)

    # Layer 1: fused "concat" -> two partial matmuls, f32 accumulation.
    h = jnp.dot(x_ref[...], w1i_ref[...], preferred_element_type=jnp.float32)
    h = h + jnp.dot(e_ref[...], w1e_ref[...],
                    preferred_element_type=jnp.float32)
    h = h + b1_ref[...]
    h = jnp.maximum(h, 0.2 * h)                      # LeakyReLU(0.2)

    # Layer 2.
    h = jnp.dot(h.astype(jnp.bfloat16), w2_ref[...],
                preferred_element_type=jnp.float32)
    h = h + b2_ref[...]
    h = jnp.maximum(h, 0.2 * h)                      # LeakyReLU(0.2)

    # Layer 3 (2H -> 1): contract w3's hidden dim against h's hidden dim so
    # the TB logits land lane-dense as one (1, TB) row (small writeback).
    logit = jax.lax.dot_general(
        w3_ref[...].astype(jnp.bfloat16), h.astype(jnp.bfloat16),
        dimension_numbers=(((1,), (1,)), ((), ())),
        preferred_element_type=jnp.float32)          # (1, TB)
    logit = logit + b3_ref[...]                      # (1,1) broadcast
    o_ref[...] = jax.nn.sigmoid(logit)[None]         # (1, 1, TB)


# --------------------------------------------------------------------------
# Parameters
# --------------------------------------------------------------------------
def init_params(key, nb_classes, hidden_dim, embedding_dim, img_shape):
    """Logical f32 params mimicking PyTorch defaults (Embedding ~ N(0,1),
    Linear ~ U(-1/sqrt(fan_in), 1/sqrt(fan_in)))."""
    input_dim = img_shape[0] * img_shape[1] * img_shape[2] + embedding_dim
    h4, h2 = hidden_dim * 4, hidden_dim * 2
    keys = jax.random.split(key, 7)

    def lin(kw, kb, fan_in, fan_out):
        bound = 1.0 / math.sqrt(fan_in)
        w = jax.random.uniform(kw, (fan_in, fan_out), jnp.float32, -bound, bound)
        b = jax.random.uniform(kb, (1, fan_out), jnp.float32, -bound, bound)
        return w, b

    emb = jax.random.normal(keys[0], (nb_classes, embedding_dim), jnp.float32)
    w1, b1 = lin(keys[1], keys[2], input_dim, h4)
    w2, b2 = lin(keys[3], keys[4], h4, h2)
    w3, b3 = lin(keys[5], keys[6], h2, 1)
    return {"emb": emb, "w1": w1, "b1": b1, "w2": w2, "b2": b2,
            "w3": w3, "b3": b3}


def prepare_kernel_params(params, img_shape):
    """Split / pad / cast the logical params into the kernel layout.

    w1 is split row-wise into image / embedding parts (fused concat), the
    hidden output dims are zero-padded to multiples of 128 (lane alignment),
    and matmul weights are cast to bf16.  Done once, outside the hot path.
    No row padding of w1 (the input feature dims stay at their true sizes).
    """
    d_img = img_shape[0] * img_shape[1] * img_shape[2]
    h4 = params["w1"].shape[1]
    h2 = params["w2"].shape[1]
    h4_p = _round_up(h4, 128)
    h2_p = _round_up(h2, 128)

    def pad2(a, rows, cols):
        return jnp.pad(a, ((0, rows - a.shape[0]), (0, cols - a.shape[1])))

    emb_rows = params["w1"].shape[0] - d_img
    return {
        "emb": params["emb"],                                           # f32
        "w1_img": pad2(params["w1"][:d_img], d_img, h4_p).astype(jnp.bfloat16),
        "w1_emb": pad2(params["w1"][d_img:], emb_rows, h4_p).astype(jnp.bfloat16),
        "b1": pad2(params["b1"], 1, h4_p),
        "w2": pad2(params["w2"], h4_p, h2_p).astype(jnp.bfloat16),
        "b2": pad2(params["b2"], 1, h2_p),
        "w3": pad2(params["w3"].T, 1, h2_p),                            # f32
        "b3": params["b3"],                                             # f32
    }


# --------------------------------------------------------------------------
# Forward wrapper
# --------------------------------------------------------------------------
_VMEM_CAP_BYTES = 64 << 20      # valid scoped limit on every generation
_ACT_VMEM_BUDGET = 40 << 20     # budget for activations/intermediates (TB pick)


def _choose_batch_tile(B, act_bytes_per_row, act_budget):
    """TB: multiple of 16, fits VMEM budget, prefers >=2 grid steps and
    minimal batch-pad overshoot, then the largest tile."""
    if B <= 32:
        return _round_up(B, 16)
    cands = [tb for tb in (1024, 512, 256, 128)
             if tb * act_bytes_per_row <= act_budget]
    cands.append(_round_up(-(-B // 2), 16))      # "two grid steps" option
    best = None
    for tb in cands:
        b_pad = _round_up(B, tb)
        steps = b_pad // tb
        key = (0 if steps >= 2 else 1, b_pad - B, -tb)
        if best is None or key < best[1]:
            best = (tb, key)
    return best[0]


@jax.jit
def discriminator_forward(x, labels, kparams):
    """x: (B, C, H, W) float32 (NCHW), labels: (B,) int32 -> (B, 1) float32."""
    B = x.shape[0]
    x_flat = x.reshape(B, -1).astype(jnp.bfloat16)           # (B, D_img) bf16
    d_img = x_flat.shape[1]
    emb_dim = kparams["emb"].shape[1]
    h4_p = kparams["w1_img"].shape[1]
    h2_p = kparams["w2"].shape[1]

    # TODO(synk): embedding gather stays in plain JAX (tiny (B, E) lookup).
    label_embed = jnp.take(kparams["emb"], labels, axis=0).astype(jnp.bfloat16)

    # Batch tiling.
    act_row = 4 * (d_img + emb_dim) + 6 * (h4_p + h2_p) + 8   # bytes per row
    TB = _choose_batch_tile(B, act_row, _ACT_VMEM_BUDGET)
    B_pad = _round_up(B, TB)
    n_tiles = B_pad // TB

    if B_pad != B:   # pad only the small batch remainder (no feature padding)
        x_flat = jnp.pad(x_flat, ((0, B_pad - B), (0, 0)))
        label_embed = jnp.pad(label_embed, ((0, B_pad - B), (0, 0)))

    weight_bytes = (kparams["w1_img"].size + kparams["w1_emb"].size
                    + kparams["w2"].size) * 2 + (h4_p + 2 * h2_p + 1) * 4
    vmem_limit = int(min(_VMEM_CAP_BYTES,
                         max(32 << 20, weight_bytes + TB * act_row + (8 << 20))))

    const = lambda i: (0, 0)
    resident = dict(pipeline_mode=pl.Buffered(1))   # single-buffer the weights

    out = pl.pallas_call(
        _disc_mlp_kernel,
        out_shape=jax.ShapeDtypeStruct((n_tiles, 1, TB), jnp.float32),
        grid=(n_tiles,),
        in_specs=[
            pl.BlockSpec((TB, d_img), lambda i: (i, 0)),        # x tile (bf16)
            pl.BlockSpec((TB, emb_dim), lambda i: (i, 0)),      # emb tile (bf16)
            pl.BlockSpec((d_img, h4_p), const, **resident),     # w1_img (resident)
            pl.BlockSpec((emb_dim, h4_p), const, **resident),   # w1_emb (resident)
            pl.BlockSpec((1, h4_p), const, **resident),         # b1
            pl.BlockSpec((h4_p, h2_p), const, **resident),      # w2 (resident)
            pl.BlockSpec((1, h2_p), const, **resident),         # b2
            pl.BlockSpec((1, h2_p), const, **resident),         # w3 row
            pl.BlockSpec((1, 1), const, **resident),            # b3
        ],
        out_specs=pl.BlockSpec((1, 1, TB), lambda i: (i, 0, 0)),
        compiler_params=pltpu.CompilerParams(
            dimension_semantics=("parallel",),
            vmem_limit_bytes=vmem_limit),
    )(x_flat, label_embed, kparams["w1_img"], kparams["w1_emb"], kparams["b1"],
      kparams["w2"], kparams["b2"], kparams["w3"], kparams["b3"])

    return out.reshape(-1)[:B].reshape(B, 1)


# --------------------------------------------------------------------------
# Pure-JAX f32 reference
# --------------------------------------------------------------------------
def reference_forward(x, labels, params):
    B = x.shape[0]
    x_flat = x.reshape(B, -1)
    d_in = jnp.concatenate(
        [x_flat, jnp.take(params["emb"], labels, axis=0)], axis=-1)
    h = d_in @ params["w1"] + params["b1"]
    h = jnp.where(h > 0, h, 0.2 * h)
    h = h @ params["w2"] + params["b2"]
    h = jnp.where(h > 0, h, 0.2 * h)
    h = h @ params["w3"] + params["b3"]
    return jax.nn.sigmoid(h)


if __name__ == "__main__":
    nb_classes = 10
    hidden_dim = 32
    embedding_dim = 32
    img_shape = (1, 16, 16)          # (C, H, W)
    B = 2

    key = jax.random.PRNGKey(0)
    k_param, k_x, k_lbl = jax.random.split(key, 3)

    params = init_params(k_param, nb_classes, hidden_dim, embedding_dim,
                         img_shape)
    kparams = prepare_kernel_params(params, img_shape)

    x = jax.random.normal(k_x, (B,) + img_shape, jnp.float32)   # NCHW
    labels = jax.random.randint(k_lbl, (B,), 0, nb_classes, jnp.int32)

    out = discriminator_forward(x, labels, kparams)
    out = jax.block_until_ready(out)

    ref = reference_forward(x, labels, params)
    assert out.shape == (B, 1)
    # bf16 matmul weights + bf16 activations vs f32 reference -> loose tol.
    assert jnp.allclose(out, ref, atol=2e-2, rtol=2e-2), (out, ref)

    print("KERNEL_OK")
</pallas_src>

<mosaic_0001>
module attributes {stable_mosaic.version = 11 : i64} {
  func.func @_disc_mlp_kernel(%arg0: i32, %arg1: memref<16x256xbf16, #tpu.memory_space<vmem>>, %arg2: memref<16x32xbf16, #tpu.memory_space<vmem>>, %arg3: memref<256x128xbf16, #tpu.memory_space<vmem>>, %arg4: memref<32x128xbf16, #tpu.memory_space<vmem>>, %arg5: memref<1x128xf32, #tpu.memory_space<vmem>>, %arg6: memref<128x128xbf16, #tpu.memory_space<vmem>>, %arg7: memref<1x128xf32, #tpu.memory_space<vmem>>, %arg8: memref<1x128xf32, #tpu.memory_space<vmem>>, %arg9: memref<1x1xf32, #tpu.memory_space<vmem>>, %arg10: memref<1x1x16xf32, #tpu.memory_space<vmem>>) attributes {dimension_semantics = [#tpu.dimension_semantics<parallel>], iteration_bounds = array<i64: 1>, scalar_prefetch = 0 : i64, scratch_operands = 0 : i64, tpu.core_type = #tpu.core_type<tc>, window_params = [{transform_indices = @transform_0, window_bounds = array<i64: 16, 256>}, {transform_indices = @transform_1, window_bounds = array<i64: 16, 32>}, {pipeline_mode = #tpu.pipeline_mode<synchronous>, transform_indices = @transform_2, window_bounds = array<i64: 256, 128>}, {pipeline_mode = #tpu.pipeline_mode<synchronous>, transform_indices = @transform_3, window_bounds = array<i64: 32, 128>}, {pipeline_mode = #tpu.pipeline_mode<synchronous>, transform_indices = @transform_4, window_bounds = array<i64: 1, 128>}, {pipeline_mode = #tpu.pipeline_mode<synchronous>, transform_indices = @transform_5, window_bounds = array<i64: 128, 128>}, {pipeline_mode = #tpu.pipeline_mode<synchronous>, transform_indices = @transform_6, window_bounds = array<i64: 1, 128>}, {pipeline_mode = #tpu.pipeline_mode<synchronous>, transform_indices = @transform_7, window_bounds = array<i64: 1, 128>}, {pipeline_mode = #tpu.pipeline_mode<synchronous>, transform_indices = @transform_8, window_bounds = array<i64: 1, 1>}, {transform_indices = @transform_9, window_bounds = array<i64: 1, 1, 16>}]} {
    %c0 = arith.constant 0 : index
    %c0_0 = arith.constant 0 : index
    %0 = vector.load %arg1[%c0, %c0_0] : memref<16x256xbf16, #tpu.memory_space<vmem>>, vector<16x256xbf16>
    %c0_1 = arith.constant 0 : index
    %c0_2 = arith.constant 0 : index
    %1 = vector.load %arg3[%c0_1, %c0_2] : memref<256x128xbf16, #tpu.memory_space<vmem>>, vector<256x128xbf16>
    %cst = arith.constant dense<0.000000e+00> : vector<16x128xf32>
    %2 = tpu.matmul %0, %1, %cst {dimension_numbers = #tpu.dot_dimension_numbers<[1], [0], [0], [1], [0, 0, 1, 1], [], []>} : vector<16x256xbf16>, vector<256x128xbf16>, vector<16x128xf32> -> vector<16x128xf32>
    %c0_3 = arith.constant 0 : index
    %c0_4 = arith.constant 0 : index
    %3 = vector.load %arg2[%c0_3, %c0_4] : memref<16x32xbf16, #tpu.memory_space<vmem>>, vector<16x32xbf16>
    %c0_5 = arith.constant 0 : index
    %c0_6 = arith.constant 0 : index
    %4 = vector.load %arg4[%c0_5, %c0_6] : memref<32x128xbf16, #tpu.memory_space<vmem>>, vector<32x128xbf16>
    %cst_7 = arith.constant dense<0.000000e+00> : vector<16x128xf32>
    %5 = tpu.matmul %3, %4, %cst_7 {dimension_numbers = #tpu.dot_dimension_numbers<[1], [0], [0], [1], [0, 0, 1, 1], [], []>} : vector<16x32xbf16>, vector<32x128xbf16>, vector<16x128xf32> -> vector<16x128xf32>
    %6 = arith.addf %2, %5 : vector<16x128xf32>
    %c0_8 = arith.constant 0 : index
    %c0_9 = arith.constant 0 : index
    %7 = vector.load %arg5[%c0_8, %c0_9] : memref<1x128xf32, #tpu.memory_space<vmem>>, vector<1x128xf32>
    %8 = vector.broadcast %7 : vector<1x128xf32> to vector<16x128xf32>
    %9 = arith.addf %6, %8 : vector<16x128xf32>
    %cst_10 = arith.constant 2.000000e-01 : f32
    %10 = vector.broadcast %cst_10 : f32 to vector<16x128xf32>
    %11 = arith.mulf %10, %9 : vector<16x128xf32>
    %12 = arith.maximumf %9, %11 : vector<16x128xf32>
    %13 = arith.truncf %12 : vector<16x128xf32> to vector<16x128xbf16>
    %c0_11 = arith.constant 0 : index
    %c0_12 = arith.constant 0 : index
    %14 = vector.load %arg6[%c0_11, %c0_12] : memref<128x128xbf16, #tpu.memory_space<vmem>>, vector<128x128xbf16>
    %cst_13 = arith.constant dense<0.000000e+00> : vector<16x128xf32>
    %15 = tpu.matmul %13, %14, %cst_13 {dimension_numbers = #tpu.dot_dimension_numbers<[1], [0], [0], [1], [0, 0, 1, 1], [], []>} : vector<16x128xbf16>, vector<128x128xbf16>, vector<16x128xf32> -> vector<16x128xf32>
    %c0_14 = arith.constant 0 : index
    %c0_15 = arith.constant 0 : index
    %16 = vector.load %arg7[%c0_14, %c0_15] : memref<1x128xf32, #tpu.memory_space<vmem>>, vector<1x128xf32>
    %17 = vector.broadcast %16 : vector<1x128xf32> to vector<16x128xf32>
    %18 = arith.addf %15, %17 : vector<16x128xf32>
    %cst_16 = arith.constant 2.000000e-01 : f32
    %19 = vector.broadcast %cst_16 : f32 to vector<16x128xf32>
    %20 = arith.mulf %19, %18 : vector<16x128xf32>
    %21 = arith.maximumf %18, %20 : vector<16x128xf32>
    %c0_17 = arith.constant 0 : index
    %c0_18 = arith.constant 0 : index
    %22 = vector.load %arg8[%c0_17, %c0_18] : memref<1x128xf32, #tpu.memory_space<vmem>>, vector<1x128xf32>
    %23 = arith.truncf %22 : vector<1x128xf32> to vector<1x128xbf16>
    %24 = arith.truncf %21 : vector<16x128xf32> to vector<16x128xbf16>
    %cst_19 = arith.constant dense<0.000000e+00> : vector<1x16xf32>
    %25 = tpu.matmul %23, %24, %cst_19 {dimension_numbers = #tpu.dot_dimension_numbers<[1], [1], [0], [0], [0, 0, 1, 0], [], []>} : vector<1x128xbf16>, vector<16x128xbf16>, vector<1x16xf32> -> vector<1x16xf32>
    %c0_20 = arith.constant 0 : index
    %c0_21 = arith.constant 0 : index
    %26 = vector.load %arg9[%c0_20, %c0_21] : memref<1x1xf32, #tpu.memory_space<vmem>>, vector<1x1xf32>
    %27 = vector.broadcast %26 : vector<1x1xf32> to vector<1x16xf32>
    %28 = arith.addf %25, %27 : vector<1x16xf32>
    %29 = arith.negf %28 : vector<1x16xf32>
    %30 = math.exp %29 : vector<1x16xf32>
    %cst_22 = arith.constant 1.000000e+00 : f32
    %31 = vector.broadcast %cst_22 : f32 to vector<1x16xf32>
    %32 = arith.addf %31, %30 : vector<1x16xf32>
    %33 = arith.divf %31, %32 : vector<1x16xf32>
    %34 = vector.shape_cast %33 : vector<1x16xf32> to vector<1x1x16xf32>
    %c0_23 = arith.constant 0 : index
    %c0_24 = arith.constant 0 : index
    %c0_25 = arith.constant 0 : index
    %35 = vector.load %arg10[%c0_23, %c0_24, %c0_25] : memref<1x1x16xf32, #tpu.memory_space<vmem>>, vector<1x1x16xf32>
    tpu.vector_store %arg10[%c0_23, %c0_24, %c0_25], %34 {strides = array<i32>} : memref<1x1x16xf32, #tpu.memory_space<vmem>>, vector<1x1x16xf32>,
    return
  }
  func.func @transform_0(%arg0: i32) -> (i32, i32) {
    %c0_i32 = arith.constant 0 : i32
    %c0_i32_0 = arith.constant 0 : i32
    return %arg0, %c0_i32 : i32, i32
  }
  func.func @transform_1(%arg0: i32) -> (i32, i32) {
    %c0_i32 = arith.constant 0 : i32
    %c0_i32_0 = arith.constant 0 : i32
    return %arg0, %c0_i32 : i32, i32
  }
  func.func @transform_2(%arg0: i32) -> (i32, i32) {
    %c0_i32 = arith.constant 0 : i32
    %c0_i32_0 = arith.constant 0 : i32
    %c0_i32_1 = arith.constant 0 : i32
    return %c0_i32, %c0_i32_0 : i32, i32
  }
  func.func @transform_3(%arg0: i32) -> (i32, i32) {
    %c0_i32 = arith.constant 0 : i32
    %c0_i32_0 = arith.constant 0 : i32
    %c0_i32_1 = arith.constant 0 : i32
    return %c0_i32, %c0_i32_0 : i32, i32
  }
  func.func @transform_4(%arg0: i32) -> (i32, i32) {
    %c0_i32 = arith.constant 0 : i32
    %c0_i32_0 = arith.constant 0 : i32
    %c0_i32_1 = arith.constant 0 : i32
    return %c0_i32, %c0_i32_0 : i32, i32
  }
  func.func @transform_5(%arg0: i32) -> (i32, i32) {
    %c0_i32 = arith.constant 0 : i32
    %c0_i32_0 = arith.constant 0 : i32
    %c0_i32_1 = arith.constant 0 : i32
    return %c0_i32, %c0_i32_0 : i32, i32
  }
  func.func @transform_6(%arg0: i32) -> (i32, i32) {
    %c0_i32 = arith.constant 0 : i32
    %c0_i32_0 = arith.constant 0 : i32
    %c0_i32_1 = arith.constant 0 : i32
    return %c0_i32, %c0_i32_0 : i32, i32
  }
  func.func @transform_7(%arg0: i32) -> (i32, i32) {
    %c0_i32 = arith.constant 0 : i32
    %c0_i32_0 = arith.constant 0 : i32
    %c0_i32_1 = arith.constant 0 : i32
    return %c0_i32, %c0_i32_0 : i32, i32
  }
  func.func @transform_8(%arg0: i32) -> (i32, i32) {
    %c0_i32 = arith.constant 0 : i32
    %c0_i32_0 = arith.constant 0 : i32
    %c0_i32_1 = arith.constant 0 : i32
    return %c0_i32, %c0_i32_0 : i32, i32
  }
  func.func @transform_9(%arg0: i32) -> (i32, i32, i32) {
    %c0_i32 = arith.constant 0 : i32
    %c0_i32_0 = arith.constant 0 : i32
    %c0_i32_1 = arith.constant 0 : i32
    return %arg0, %c0_i32, %c0_i32_0 : i32, i32, i32
  }
}

</mosaic_0001>

<llo_original>
// kernel: discriminator_forward.1
$region0: #{discriminator_forward.1}
  #allocation0 [shape = 'u32[]', space=smem, size = 0x4, offset = 0x4, fixed_abs, tag = 'smem constant byte address 0x4 - core index']
  #allocation1 [shape = 'u32[144,128]{1,0:T(1,128)}', space=vmem, size = 0x12000, scoped, tag = 'internal scratch']
  #allocation2 [shape = 'f32[1,1]{1,0:T(1,128)S(1)}', space=vmem, size = 0x200, scoped, tag = 'scoped memory for discriminator_forward.1']
  %s0 = inlined_call_operand.vmem [shape: bf16[16,256], index: 0, kind: input, shape index: {}]
  %s1 = inlined_call_operand.vmem [shape: bf16[16,32], index: 1, kind: input, shape index: {}]
  %s2 = inlined_call_operand.vmem [shape: bf16[256,128], index: 2, kind: input, shape index: {}]
  %s3 = inlined_call_operand.hbm [shape: bf16[32,128], index: 3, kind: input, shape index: {}]
  %s4 = inlined_call_operand.vmem [shape: f32[1,128], index: 4, kind: input, shape index: {}]
  %s5 = inlined_call_operand.hbm [shape: bf16[128,128], index: 5, kind: input, shape index: {}]
  %s6 = inlined_call_operand.vmem [shape: f32[1,128], index: 6, kind: input, shape index: {}]
  %s7 = inlined_call_operand.vmem [shape: f32[1,128], index: 7, kind: input, shape index: {}]
  %s8 = inlined_call_operand.<no memory space> [shape: f32[1,1], index: 8, kind: input, shape index: {}]
  %s9 = inlined_call_operand.vmem [shape: f32[1,1,16], index: 9, kind: output, shape index: {}]
  %s10 = sld [smem:[#allocation0]]
  $region54: #{discriminator_forward.1} parent=0
    _
  %s12 = ssub.s32 1, %s10
  %s13 = scalar_select 0, %s12, %s10
  %v14 = vstv %s8
  %15 = vst [vmem:[#allocation2] sm:$0x1] %v14
  $region1: #{discriminator_forward.1} parent=0
    #allocation3 [shape = 'u8[8192]{0}', space=vmem, size = 0x2000, scoped, tag = 'input window, operand 3, single buffered']
    #allocation4 [shape = 's32[1]{0}', space=sflag, size = 0x4, scoped, tag = 'scoped memory for discriminator_forward.1']
    #allocation5 [shape = 'u8[32768]{0}', space=vmem, size = 0x8000, scoped, tag = 'input window, operand 5, single buffered']
    #allocation6 [shape = 's32[1]{0}', space=sflag, size = 0x4, scoped, tag = 'scoped memory for discriminator_forward.1']
    %16 = vsyncpa [#allocation4], 0
    %17 = vsyncpa [#allocation6], 0
    // Predicated region
    $region2: #{discriminator_forward.1} parent=1 // pred_check
      _
    $region3: #{discriminator_forward.1} parent=1 // pred_check_branch
      %19 = sbr.rel (0) target = $region5
    $region4: #{discriminator_forward.1} parent=1 // pred_region
      _
    $region5: #{discriminator_forward.1} parent=1 // pred_fallthru
      _
    // Predicated region
    $region6: #{discriminator_forward.1} parent=1 // pred_check
      _
    $region7: #{discriminator_forward.1} parent=1 // pred_check_branch
      %21 = sbr.rel (0) target = $region9
    $region8: #{discriminator_forward.1} parent=1 // pred_region
      _
    $region9: #{discriminator_forward.1} parent=1 // pred_fallthru
      _
    // Predicated region
    $region10: #{discriminator_forward.1} parent=1 // pred_check
      _
    $region11: #{discriminator_forward.1} parent=1 // pred_check_branch
      %23 = sbr.rel (0) target = $region13
    $region12: #{discriminator_forward.1} parent=1 // pred_region
      _
    $region13: #{discriminator_forward.1} parent=1 // pred_fallthru
      _
    // Predicated region
    $region14: #{discriminator_forward.1} parent=1 // pred_check
      _
    $region15: #{discriminator_forward.1} parent=1 // pred_check_branch
      %25 = sbr.rel (0) target = $region17
    $region16: #{discriminator_forward.1} parent=1 // pred_region
      %s27 = ssub.s32 256, 256
      %28 = vsyncadd [#allocation4], %s27
      %s29 = sshll.u32 [#allocation3], 4
      %s30 = int_to_ptr.vmem [resolvable:$true] %s29
      %35 = dma.hbm_to_vmem [thread:$0]  %s3, 256, %s30, [#allocation4], 64, 64, 4
    $region17: #{discriminator_forward.1} parent=1 // pred_fallthru
      _
    // Predicated region
    $region18: #{discriminator_forward.1} parent=1 // pred_check
      _
    $region19: #{discriminator_forward.1} parent=1 // pred_check_branch
      %37 = sbr.rel (0) target = $region21
    $region20: #{discriminator_forward.1} parent=1 // pred_region
      _
    $region21: #{discriminator_forward.1} parent=1 // pred_fallthru
      _
    // Predicated region
    $region22: #{discriminator_forward.1} parent=1 // pred_check
      _
    $region23: #{discriminator_forward.1} parent=1 // pred_check_branch
      %39 = sbr.rel (0) target = $region25
    $region24: #{discriminator_forward.1} parent=1 // pred_region
      %s41 = ssub.s32 1024, 1024
      %42 = vsyncadd [#allocation6], %s41
      %s43 = sshll.u32 [#allocation5], 4
      %s44 = int_to_ptr.vmem [resolvable:$true] %s43
      %49 = dma.hbm_to_vmem [thread:$0]  %s5, 1024, %s44, [#allocation6], 64, 64, 4
    $region25: #{discriminator_forward.1} parent=1 // pred_fallthru
      _
    // Predicated region
    $region26: #{discriminator_forward.1} parent=1 // pred_check
      _
    $region27: #{discriminator_forward.1} parent=1 // pred_check_branch
      %51 = sbr.rel (0) target = $region29
    $region28: #{discriminator_forward.1} parent=1 // pred_region
      _
    $region29: #{discriminator_forward.1} parent=1 // pred_fallthru
      _
    // Predicated region
    $region30: #{discriminator_forward.1} parent=1 // pred_check
      _
    $region31: #{discriminator_forward.1} parent=1 // pred_check_branch
      %53 = sbr.rel (0) target = $region33
    $region32: #{discriminator_forward.1} parent=1 // pred_region
      _
    $region33: #{discriminator_forward.1} parent=1 // pred_fallthru
      _
    // Predicated region
    $region34: #{discriminator_forward.1} parent=1 // pred_check
      _
    $region35: #{discriminator_forward.1} parent=1 // pred_check_branch
      %55 = sbr.rel (0) target = $region37
    $region36: #{discriminator_forward.1} parent=1 // pred_region
      _
    $region37: #{discriminator_forward.1} parent=1 // pred_fallthru
      _
    // Predicated region
    $region38: #{discriminator_forward.1} parent=1 // pred_check
      _
    $region39: #{discriminator_forward.1} parent=1 // pred_check_branch
      %57 = sbr.rel (0) target = $region41
    $region40: #{discriminator_forward.1} parent=1 // pred_region
      %58 = dma.done [#allocation4], 256
    $region41: #{discriminator_forward.1} parent=1 // pred_fallthru
      _
    // Predicated region
    $region42: #{discriminator_forward.1} parent=1 // pred_check
      _
    $region43: #{discriminator_forward.1} parent=1 // pred_check_branch
      %60 = sbr.rel (0) target = $region45
    $region44: #{discriminator_forward.1} parent=1 // pred_region
      %61 = dma.done [#allocation6], 1024
    $region45: #{discriminator_forward.1} parent=1 // pred_fallthru
      _
    %v63 = vld [vmem:[%s0] sm:$0xff]
    %v64 = vld [vmem:[%s0 + $0x8] sm:$0xff]
    %v65 = vld [vmem:[%s2] sm:$0xf]
    %v66 = vld [vmem:[%s2 + $0x4] sm:$0xf]
    %v67 = vld [vmem:[%s2 + $0x8] sm:$0xf]
    %v68 = vld [vmem:[%s2 + $0xc] sm:$0xf]
    %v69 = vld [vmem:[%s2 + $0x10] sm:$0xf]
    %v70 = vld [vmem:[%s2 + $0x14] sm:$0xf]
    %v71 = vld [vmem:[%s2 + $0x18] sm:$0xf]
    %v72 = vld [vmem:[%s2 + $0x1c] sm:$0xf]
    %v73 = vld [vmem:[%s2 + $0x20] sm:$0xf]
    %v74 = vld [vmem:[%s2 + $0x24] sm:$0xf]
    %v75 = vld [vmem:[%s2 + $0x28] sm:$0xf]
    %v76 = vld [vmem:[%s2 + $0x2c] sm:$0xf]
    %v77 = vld [vmem:[%s2 + $0x30] sm:$0xf]
    %v78 = vld [vmem:[%s2 + $0x34] sm:$0xf]
    %v79 = vld [vmem:[%s2 + $0x38] sm:$0xf]
    %v80 = vld [vmem:[%s2 + $0x3c] sm:$0xf]
    %v81 = vld [vmem:[%s2 + $0x40] sm:$0xf]
    %v82 = vld [vmem:[%s2 + $0x44] sm:$0xf]
    %v83 = vld [vmem:[%s2 + $0x48] sm:$0xf]
    %v84 = vld [vmem:[%s2 + $0x4c] sm:$0xf]
    %v85 = vld [vmem:[%s2 + $0x50] sm:$0xf]
    %v86 = vld [vmem:[%s2 + $0x54] sm:$0xf]
    %v87 = vld [vmem:[%s2 + $0x58] sm:$0xf]
    %v88 = vld [vmem:[%s2 + $0x5c] sm:$0xf]
    %v89 = vld [vmem:[%s2 + $0x60] sm:$0xf]
    %v90 = vld [vmem:[%s2 + $0x64] sm:$0xf]
    %v91 = vld [vmem:[%s2 + $0x68] sm:$0xf]
    %v92 = vld [vmem:[%s2 + $0x6c] sm:$0xf]
    %v93 = vld [vmem:[%s2 + $0x70] sm:$0xf]
    %v94 = vld [vmem:[%s2 + $0x74] sm:$0xf]
    %v95 = vld [vmem:[%s2 + $0x78] sm:$0xf]
    %v96 = vld [vmem:[%s2 + $0x7c] sm:$0xf]
    %v97 = vld [vmem:[%s1] sm:$0xf]
    %v98 = vld [vmem:[%s1 + $0x4] sm:$0xf]
    %v99 = vld [vmem:[#allocation3] sm:$0xf]
    %v100 = vld [vmem:[#allocation3 + $0x4] sm:$0xf]
    %v101 = vld [vmem:[#allocation3 + $0x8] sm:$0xf]
    %v102 = vld [vmem:[#allocation3 + $0xc] sm:$0xf]
    %v105 = vunpack.c.l.b16 %v97
    %v106 = vunpack.c.l.b16 %v98
    %v107 = vpack.c.b16 %v106, %v105
    %v112 = vunpack.c.l.b16 %v99
    %v113 = vunpack.c.l.b16 %v100
    %v114 = vunpack.c.l.b16 %v101
    %v115 = vunpack.c.l.b16 %v102
    %v116 = vpack.c.b16 %v113, %v112
    %v117 = vpack.c.b16 %v115, %v114
    %vm120 = vcmask 261120
    %v122 = vsel %vm120, %v107, 0
    %124 = vmatprep.subr.bf16.mxu0 0
    %125 = vmatpush1.bf16.msra.mxu0 %v116
    %126 = vmatprep.subr.bf16.mxu0 0
    %127 = vmatpush1.bf16.msra.mxu0 %v117
    %128 = vmatprep.subr.bf16.mxu0 0
    %129 = vmatpush1.bf16.msra.mxu0 0
    %130 = vmatprep.subr.bf16.mxu0 0
    %131 = vmatpush1.bf16.msra.mxu0 0
    %132 = vmatprep.subr.bf16.mxu0 0
    %133 = vmatpush1.bf16.msra.mxu0 0
    %134 = vmatprep.subr.bf16.mxu0 0
    %135 = vmatpush1.bf16.msra.mxu0 0
    %136 = vmatprep.subr.bf16.mxu0 0
    %137 = vmatpush1.bf16.msra.mxu0 0
    %138 = vmatprep.subr.bf16.mxu0 0
    %139 = vmatpush1.bf16.msra.mxu0 0
    %140 = vmatprep.subr.bf16.mxu0 0
    %141 = vmatpush1.bf16.msra.mxu0 0
    %142 = vmatprep.subr.bf16.mxu0 0
    %143 = vmatpush1.bf16.msra.mxu0 0
    %144 = vmatprep.subr.bf16.mxu0 0
    %145 = vmatpush1.bf16.msra.mxu0 0
    %146 = vmatprep.subr.bf16.mxu0 0
    %147 = vmatpush1.bf16.msra.mxu0 0
    %148 = vmatprep.subr.bf16.mxu0 0
    %149 = vmatpush1.bf16.msra.mxu0 0
    %150 = vmatprep.subr.bf16.mxu0 0
    %151 = vmatpush1.bf16.msra.mxu0 0
    %152 = vmatprep.subr.bf16.mxu0 0
    %153 = vmatpush1.bf16.msra.mxu0 0
    %154 = vmatprep.subr.bf16.mxu0 0
    %155 = vmatpush1.bf16.msra.mxu0 0
    %156 = vmatprep.mubr.bf16.mxu0 0
    %157 = vmatmul.mubr.bf16.gmra.mrb[0].mxu0 %v122
    %v158 = vpop.f32.mrb[0].mxu0
    %v159 = vadd.f32 0.0, %v158
    %v160 = vpop.f32.mrb[0].mxu0
    %v161 = vpop.f32.mrb[0].mxu0
    %v162 = vadd.f32 0.0, %v161
    %v163 = vpop.f32.mrb[0].mxu0
    %164 = vdwg.mxu0
    %v167 = vunpack.c.l.b16 %v63
    %v168 = vunpack.c.h.b16 %v63
    %v169 = vunpack.c.l.b16 %v64
    %v170 = vunpack.c.h.b16 %v64
    %v171 = vpack.c.b16 %v169, %v167
    %v172 = vpack.c.b16 %v170, %v168
    %v207 = vunpack.c.l.b16 %v65
    %v208 = vunpack.c.l.b16 %v66
    %v209 = vunpack.c.l.b16 %v67
    %v210 = vunpack.c.l.b16 %v68
    %v211 = vunpack.c.l.b16 %v69
    %v212 = vunpack.c.l.b16 %v70
    %v213 = vunpack.c.l.b16 %v71
    %v214 = vunpack.c.l.b16 %v72
    %v215 = vunpack.c.l.b16 %v73
    %v216 = vunpack.c.l.b16 %v74
    %v217 = vunpack.c.l.b16 %v75
    %v218 = vunpack.c.l.b16 %v76
    %v219 = vunpack.c.l.b16 %v77
    %v220 = vunpack.c.l.b16 %v78
    %v221 = vunpack.c.l.b16 %v79
    %v222 = vunpack.c.l.b16 %v80
    %v223 = vunpack.c.l.b16 %v81
    %v224 = vunpack.c.l.b16 %v82
    %v225 = vunpack.c.l.b16 %v83
    %v226 = vunpack.c.l.b16 %v84
    %v227 = vunpack.c.l.b16 %v85
    %v228 = vunpack.c.l.b16 %v86
    %v229 = vunpack.c.l.b16 %v87
    %v230 = vunpack.c.l.b16 %v88
    %v231 = vunpack.c.l.b16 %v89
    %v232 = vunpack.c.l.b16 %v90
    %v233 = vunpack.c.l.b16 %v91
    %v234 = vunpack.c.l.b16 %v92
    %v235 = vunpack.c.l.b16 %v93
    %v236 = vunpack.c.l.b16 %v94
    %v237 = vunpack.c.l.b16 %v95
    %v238 = vunpack.c.l.b16 %v96
    %v239 = vpack.c.b16 %v208, %v207
    %v240 = vpack.c.b16 %v210, %v209
    %v241 = vpack.c.b16 %v212, %v211
    %v242 = vpack.c.b16 %v214, %v213
    %v243 = vpack.c.b16 %v216, %v215
    %v244 = vpack.c.b16 %v218, %v217
    %v245 = vpack.c.b16 %v220, %v219
    %v246 = vpack.c.b16 %v222, %v221
    %v247 = vpack.c.b16 %v224, %v223
    %v248 = vpack.c.b16 %v226, %v225
    %v249 = vpack.c.b16 %v228, %v227
    %v250 = vpack.c.b16 %v230, %v229
    %v251 = vpack.c.b16 %v232, %v231
    %v252 = vpack.c.b16 %v234, %v233
    %v253 = vpack.c.b16 %v236, %v235
    %v254 = vpack.c.b16 %v238, %v237
    %271 = vmatprep.subr.bf16.mxu0 0
    %272 = vmatpush1.bf16.msra.mxu0 %v239
    %273 = vmatprep.subr.bf16.mxu0 0
    %274 = vmatpush1.bf16.msra.mxu0 %v240
    %275 = vmatprep.subr.bf16.mxu0 0
    %276 = vmatpush1.bf16.msra.mxu0 %v241
    %277 = vmatprep.subr.bf16.mxu0 0
    %278 = vmatpush1.bf16.msra.mxu0 %v242
    %279 = vmatprep.subr.bf16.mxu0 0
    %280 = vmatpush1.bf16.msra.mxu0 %v243
    %281 = vmatprep.subr.bf16.mxu0 0
    %282 = vmatpush1.bf16.msra.mxu0 %v244
    %283 = vmatprep.subr.bf16.mxu0 0
    %284 = vmatpush1.bf16.msra.mxu0 %v245
    %285 = vmatprep.subr.bf16.mxu0 0
    %286 = vmatpush1.bf16.msra.mxu0 %v246
    %287 = vmatprep.subr.bf16.mxu0 0
    %288 = vmatpush1.bf16.msra.mxu0 %v247
    %289 = vmatprep.subr.bf16.mxu0 0
    %290 = vmatpush1.bf16.msra.mxu0 %v248
    %291 = vmatprep.subr.bf16.mxu0 0
    %292 = vmatpush1.bf16.msra.mxu0 %v249
    %293 = vmatprep.subr.bf16.mxu0 0
    %294 = vmatpush1.bf16.msra.mxu0 %v250
    %295 = vmatprep.subr.bf16.mxu0 0
    %296 = vmatpush1.bf16.msra.mxu0 %v251
    %297 = vmatprep.subr.bf16.mxu0 0
    %298 = vmatpush1.bf16.msra.mxu0 %v252
    %299 = vmatprep.subr.bf16.mxu0 0
    %300 = vmatpush1.bf16.msra.mxu0 %v253
    %301 = vmatprep.subr.bf16.mxu0 0
    %302 = vmatpush1.bf16.msra.mxu0 %v254
    %303 = vmatprep.mubr.bf16.mxu0 %v172
    %304 = vmatmul.mubr.bf16.gmra.mrb[0].mxu0 %v171
    %v305 = vpop.f32.mrb[0].mxu0
    %v306 = vadd.f32 %v159, %v305
    %v307 = vpop.f32.mrb[0].mxu0
    %v308 = vpop.f32.mrb[0].mxu0
    %v309 = vadd.f32 %v162, %v308
    %v310 = vpop.f32.mrb[0].mxu0
    %311 = vdwg.mxu0
    %v312 = vld [vmem:[%s4] sm:$0x1]
    %v314 = vlaneseq
    %v315 = vshrl.u32 %v314, 7
    %v316 = vsub.s32 0, %v315
    %v317 = vrot.slane %v312, %v316
    %v319 = vadd.f32 %v306, %v317
    %v320 = vadd.f32 %v309, %v317
    %v321 = vmul.f32 %v319, 0.2
    %v322 = vmul.f32 %v320, 0.2
    %v323 = vmax.f32 %v319, %v321
    %v324 = vmax.f32 %v320, %v322
    %v325 = vpack.c.bf16 %v324, %v323
    %v326 = vld [vmem:[#allocation5] sm:$0xf]
    %v327 = vld [vmem:[#allocation5 + $0x4] sm:$0xf]
    %v328 = vld [vmem:[#allocation5 + $0x8] sm:$0xf]
    %v329 = vld [vmem:[#allocation5 + $0xc] sm:$0xf]
    %v330 = vld [vmem:[#allocation5 + $0x10] sm:$0xf]
    %v331 = vld [vmem:[#allocation5 + $0x14] sm:$0xf]
    %v332 = vld [vmem:[#allocation5 + $0x18] sm:$0xf]
    %v333 = vld [vmem:[#allocation5 + $0x1c] sm:$0xf]
    %v334 = vld [vmem:[#allocation5 + $0x20] sm:$0xf]
    %v335 = vld [vmem:[#allocation5 + $0x24] sm:$0xf]
    %v336 = vld [vmem:[#allocation5 + $0x28] sm:$0xf]
    %v337 = vld [vmem:[#allocation5 + $0x2c] sm:$0xf]
    %v338 = vld [vmem:[#allocation5 + $0x30] sm:$0xf]
    %v339 = vld [vmem:[#allocation5 + $0x34] sm:$0xf]
    %v340 = vld [vmem:[#allocation5 + $0x38] sm:$0xf]
    %v341 = vld [vmem:[#allocation5 + $0x3c] sm:$0xf]
    %v342 = vld [vmem:[%s6] sm:$0x1]
    %v344 = vlaneseq
    %v345 = vshrl.u32 %v344, 7
    %v346 = vsub.s32 0, %v345
    %v347 = vrot.slane %v342, %v346
    %v365 = vunpack.c.l.b16 %v326
    %v366 = vunpack.c.l.b16 %v327
    %v367 = vunpack.c.l.b16 %v328
    %v368 = vunpack.c.l.b16 %v329
    %v369 = vunpack.c.l.b16 %v330
    %v370 = vunpack.c.l.b16 %v331
    %v371 = vunpack.c.l.b16 %v332
    %v372 = vunpack.c.l.b16 %v333
    %v373 = vunpack.c.l.b16 %v334
    %v374 = vunpack.c.l.b16 %v335
    %v375 = vunpack.c.l.b16 %v336
    %v376 = vunpack.c.l.b16 %v337
    %v377 = vunpack.c.l.b16 %v338
    %v378 = vunpack.c.l.b16 %v339
    %v379 = vunpack.c.l.b16 %v340
    %v380 = vunpack.c.l.b16 %v341
    %v381 = vpack.c.b16 %v366, %v365
    %v382 = vpack.c.b16 %v368, %v367
    %v383 = vpack.c.b16 %v370, %v369
    %v384 = vpack.c.b16 %v372, %v371
    %v385 = vpack.c.b16 %v374, %v373
    %v386 = vpack.c.b16 %v376, %v375
    %v387 = vpack.c.b16 %v378, %v377
    %v388 = vpack.c.b16 %v380, %v379
    %397 = vmatprep.subr.bf16.mxu0 0
    %398 = vmatpush1.bf16.msra.mxu0 %v381
    %399 = vmatprep.subr.bf16.mxu0 0
    %400 = vmatpush1.bf16.msra.mxu0 %v382
    %401 = vmatprep.subr.bf16.mxu0 0
    %402 = vmatpush1.bf16.msra.mxu0 %v383
    %403 = vmatprep.subr.bf16.mxu0 0
    %404 = vmatpush1.bf16.msra.mxu0 %v384
    %405 = vmatprep.subr.bf16.mxu0 0
    %406 = vmatpush1.bf16.msra.mxu0 %v385
    %407 = vmatprep.subr.bf16.mxu0 0
    %408 = vmatpush1.bf16.msra.mxu0 %v386
    %409 = vmatprep.subr.bf16.mxu0 0
    %410 = vmatpush1.bf16.msra.mxu0 %v387
    %411 = vmatprep.subr.bf16.mxu0 0
    %412 = vmatpush1.bf16.msra.mxu0 %v388
    %413 = vmatprep.subr.bf16.mxu0 0
    %414 = vmatpush1.bf16.msra.mxu0 0
    %415 = vmatprep.subr.bf16.mxu0 0
    %416 = vmatpush1.bf16.msra.mxu0 0
    %417 = vmatprep.subr.bf16.mxu0 0
    %418 = vmatpush1.bf16.msra.mxu0 0
    %419 = vmatprep.subr.bf16.mxu0 0
    %420 = vmatpush1.bf16.msra.mxu0 0
    %421 = vmatprep.subr.bf16.mxu0 0
    %422 = vmatpush1.bf16.msra.mxu0 0
    %423 = vmatprep.subr.bf16.mxu0 0
    %424 = vmatpush1.bf16.msra.mxu0 0
    %425 = vmatprep.subr.bf16.mxu0 0
    %426 = vmatpush1.bf16.msra.mxu0 0
    %427 = vmatprep.subr.bf16.mxu0 0
    %428 = vmatpush1.bf16.msra.mxu0 0
    %429 = vmatprep.mubr.bf16.mxu0 0
    %430 = vmatmul.mubr.bf16.gmra.mrb[0].mxu0 %v325
    %v431 = vpop.f32.mrb[0].mxu0
    %v432 = vadd.f32 %v347, %v431
    %v433 = vpop.f32.mrb[0].mxu0
    %v434 = vpop.f32.mrb[0].mxu0
    %v435 = vadd.f32 %v347, %v434
    %v436 = vpop.f32.mrb[0].mxu0
    %437 = vdwg.mxu0
    %v438 = vmul.f32 %v432, 0.2
    %v439 = vmul.f32 %v435, 0.2
    %v440 = vmax.f32 %v432, %v438
    %v441 = vmax.f32 %v435, %v439
    %v442 = vld [vmem:[%s7] sm:$0x1]
    %v443 = vpack.c.bf16 %v442, %v442
    %v444 = vpack.c.bf16 %v441, %v440
    %v445 = vld [vmem:[#allocation2] sm:$0x1]
    %447 = vset.pattern.permute.xlu0 0
    %448 = vperm.xlu0 %447, %v445
    %v449 = vpop.permute.xlu0 %448
    %v451 = vlaneseq
    %v452 = vshrl.u32 %v451, 7
    %v453 = vsub.s32 0, %v452
    %v454 = vrot.slane %v449, %v453
    %455 = vmatprep.subr.bf16.mxu0 0
    %456 = vmatpush1.bf16.xpose.msra.mxu0 %v444
    %457 = vmatprep.subr.bf16.mxu0 0
    %458 = vmatpush1.bf16.xpose.msra.mxu0 0
    %459 = vmatprep.subr.bf16.mxu0 0
    %460 = vmatpush1.bf16.xpose.msra.mxu0 0
    %461 = vmatprep.subr.bf16.mxu0 0
    %462 = vmatpush1.bf16.xpose.msra.mxu0 0
    %463 = vmatprep.subr.bf16.mxu0 0
    %464 = vmatpush1.bf16.xpose.msra.mxu0 0
    %465 = vmatprep.subr.bf16.mxu0 0
    %466 = vmatpush1.bf16.xpose.msra.mxu0 0
    %467 = vmatprep.subr.bf16.mxu0 0
    %468 = vmatpush1.bf16.xpose.msra.mxu0 0
    %469 = vmatprep.subr.bf16.mxu0 0
    %470 = vmatpush1.bf16.xpose.msra.mxu0 0
    %471 = vmatprep.subr.bf16.mxu0 0
    %472 = vmatpush1.bf16.xpose.msra.mxu0 0
    %473 = vmatprep.subr.bf16.mxu0 0
    %474 = vmatpush1.bf16.xpose.msra.mxu0 0
    %475 = vmatprep.subr.bf16.mxu0 0
    %476 = vmatpush1.bf16.xpose.msra.mxu0 0
    %477 = vmatprep.subr.bf16.mxu0 0
    %478 = vmatpush1.bf16.xpose.msra.mxu0 0
    %479 = vmatprep.subr.bf16.mxu0 0
    %480 = vmatpush1.bf16.xpose.msra.mxu0 0
    %481 = vmatprep.subr.bf16.mxu0 0
    %482 = vmatpush1.bf16.xpose.msra.mxu0 0
    %483 = vmatprep.subr.bf16.mxu0 0
    %484 = vmatpush1.bf16.xpose.msra.mxu0 0
    %485 = vmatprep.subr.bf16.mxu0 0
    %486 = vmatpush1.bf16.xpose.msra.mxu0 0
    %487 = vmatprep.mubr.bf16.mxu0 0
    %488 = vmatmul.mubr.bf16.gmra.mrb[0].mxu0 %v443
    %v489 = vpop.f32.mrb[0].mxu0
    %v490 = vadd.f32 %v454, %v489
    %v491 = vpop.f32.mrb[0].mxu0
    %v492 = vpop.f32.mrb[0].mxu0
    %v493 = vpop.f32.mrb[0].mxu0
    %494 = vdwg.mxu0
    %v495 = vxor.u32 %v490, 2147483648
    %v496 = vmul.f32 %v495, 1.442695
    %v497 = vpow.pop %v496
    %v498 = vadd.f32 %v497, 1.0
    %v499 = vrcp.pop %v498
    %v500 = vmul.f32 1.0, %v499
    %vm501 = vcmask 122880
    %502 = vst.msk [vmem:[%s9] sm:$0x1] %vm501, %v500
    // Predicated region
    $region46: #{discriminator_forward.1} parent=1 // pred_check
      _
    $region47: #{discriminator_forward.1} parent=1 // pred_check_branch
      %504 = sbr.rel (0) target = $region49
    $region48: #{discriminator_forward.1} parent=1 // pred_region
      _
    $region49: #{discriminator_forward.1} parent=1 // pred_fallthru
      _
    // Predicated region
    $region50: #{discriminator_forward.1} parent=1 // pred_check
      _
    $region51: #{discriminator_forward.1} parent=1 // pred_check_branch
      %506 = sbr.rel (0) target = $region53
    $region52: #{discriminator_forward.1} parent=1 // pred_region
      _
    $region53: #{discriminator_forward.1} parent=1 // pred_fallthru
      _
    %507 = vsyncpa [#allocation4], 1
    %508 = vsyncpa [#allocation6], 1

</llo_original>
